<compile_context>
chip_gen: v7x
topology: tpu7x:2x2x1
jax: 0.10.0
libtpu: 0.0.40
codegen_flags: <defaults>
</compile_context>

<pallas_src>
import functools

import jax
import jax.numpy as jnp
from jax import lax
from jax.experimental import pallas as pl
from jax.experimental.pallas import tpu as pltpu

ALPHA = 1.0        # FocalLoss defaults
GAMMA = 2.0
POS_WEIGHT = None

_TILE_TARGET_BYTES = 2 * 1024 * 1024   # per-input f32 tile; 2 in x 2 buf = 8 MiB


def _round_up(x, m):
    return ((x + m - 1) // m) * m


def _cdiv(a, b):
    return (a + b - 1) // b


def _focal_loss_kernel(x_ref, t_ref, o_ref, acc_ref, *,
                       n_total, steps_per_slice, block_rows, block_cols,
                       full_blocks, needs_mask, alpha, gamma, pos_weight):
    p = pl.program_id(0)            # parallel slice (one per TensorCore on v7x)
    i = pl.program_id(1)            # sequential reduction step

    @pl.when(i == 0)
    def _():
        acc_ref[...] = jnp.zeros_like(acc_ref)

    x = x_ref[...].astype(jnp.float32)
    t = t_ref[...].astype(jnp.float32)

    # ---- numerically-stable BCE-with-logits (reduction='none') -------------
    #   softplus(x)  = max(x,0) + log(1 + exp(-|x|)) = -log(1 - sigmoid(x))
    #   softplus(-x) = softplus(x) - x               = -log(sigmoid(x))
    e = jnp.exp(-jnp.abs(x))                    # EUP
    d = 1.0 + e
    sp_pos = jnp.maximum(x, 0.0) + jnp.log(d)   # softplus(x); log on EUP
    if pos_weight is None:
        # t*softplus(-x) + (1-t)*softplus(x) == softplus(x) - t*x
        ce = sp_pos - t * x
    else:
        ce = (pos_weight * t) * (sp_pos - x) + (1.0 - t) * sp_pos

    # ---- sigmoid from the same exp(-|x|): EUP reciprocal + 1 Newton step ----
    r = pl.reciprocal(d, approx=True)           # EUP vrcp (~2^-12 rel. err.)
    r = r * (2.0 - d * r)                       # Newton -> full f32 accuracy
    probs = jnp.where(x >= 0.0, r, e * r)       # sigmoid(x)

    # 1 - p_t  ==  probs + t - 2*probs*t
    one_minus_pt = probs + t - 2.0 * (probs * t)

    if float(gamma) == 2.0:
        focal_w = one_minus_pt * one_minus_pt
    elif float(gamma) == int(gamma):
        focal_w = lax.integer_pow(one_minus_pt, int(gamma))
    else:
        focal_w = jnp.power(one_minus_pt, jnp.float32(gamma))

    if alpha is None:
        loss = focal_w * ce
    elif float(alpha) == 1.0:
        loss = t * (focal_w * ce)               # alpha_t == targets
    else:
        alpha_t = (1.0 - alpha) + (2.0 * alpha - 1.0) * t
        loss = alpha_t * (focal_w * ce)

    gb = p * steps_per_slice + i                # global row-block index

    def _accumulate(v):
        # Lane-reduce on the XLU (idle otherwise); only TM/8 vreg adds hit the
        # VALU and the scratch is (TM, 1) instead of a full (TM, C) tile.
        acc_ref[...] += jnp.sum(v, axis=1, keepdims=True)

    if needs_mask:
        # Only blocks at/after `full_blocks` touch the pad / ragged tail (or
        # are fully out of range); steady-state tiles skip the mask math.
        @pl.when(gb >= full_blocks)
        def _():
            row = lax.broadcasted_iota(jnp.int32, (block_rows, block_cols), 0)
            col = lax.broadcasted_iota(jnp.int32, (block_rows, block_cols), 1)
            flat = (gb * block_rows + row) * block_cols + col
            _accumulate(jnp.where(flat < n_total, loss, 0.0))

        @pl.when(gb < full_blocks)
        def _():
            _accumulate(loss)
    else:
        _accumulate(loss)

    @pl.when(i == steps_per_slice - 1)
    def _():
        # single cross-sublane reduce per parallel slice, once per call
        o_ref[...] = jnp.sum(acc_ref[...]).reshape(1, 1, 1)


def focal_loss(inputs, targets, alpha=ALPHA, gamma=GAMMA, pos_weight=POS_WEIGHT,
               *, block_rows=None, block_cols=512, num_parallel=2):
    """Pallas implementation of FocalLoss.forward; returns a scalar f32 mean."""
    assert inputs.shape == targets.shape
    n_total = int(inputs.size)
    assert 0 < n_total < 2 ** 31, "int32 flat indexing"

    last = int(inputs.shape[-1]) if inputs.ndim else 1
    fast = (inputs.ndim >= 2 and last % 128 == 0 and last <= 8192
            and (n_total // last) % 8 == 0)
    if fast:
        # Copy-free path: trailing dim already lane-aligned; collapsing the
        # leading dims is free -> no padding, no extra HBM round-trip.
        C = last
        rows = n_total // C
        x2 = inputs.reshape(rows, C)
        t2 = targets.reshape(rows, C)
    else:
        # Ragged shapes: flatten + pad only the tail (< C + 8 rows of slack).
        # TODO(synk): this jnp.pad still costs one extra HBM round-trip; keep
        # the label dim a multiple of 128 upstream to hit the copy-free path.
        C = int(block_cols)
        assert C % 128 == 0
        rows = _round_up(_cdiv(n_total, C), 8)
        pad = rows * C - n_total

        def _prep(a):
            flat = a.reshape(-1)
            if pad:
                flat = jnp.pad(flat, (0, pad))
            return flat.reshape(rows, C)

        x2 = _prep(inputs)
        t2 = _prep(targets)

    # Tile rows: biggest tile that keeps 2 inputs x 2 buffers around ~8 MiB.
    if block_rows is None:
        tm = max(8, (_TILE_TARGET_BYTES // (C * 4)) // 8 * 8)
        tm = min(tm, 1024)
    else:
        tm = _round_up(int(block_rows), 8)
    TM = max(8, min(tm, _round_up(rows, 8)))

    total_blocks = _cdiv(rows, TM)
    P = max(1, min(int(num_parallel), total_blocks))
    steps = _cdiv(total_blocks, P)
    coverage = P * steps * TM * C
    assert coverage < 2 ** 31, "int32 flat indexing"
    full_blocks = n_total // (TM * C)       # blocks with no pad / ragged tail
    needs_mask = coverage != n_total

    last_block = total_blocks - 1

    def in_map(p, i):
        # Clamp fully-out-of-range steps (uneven P split) onto the last block;
        # their contribution is zeroed by the in-kernel mask.
        return (jnp.minimum(p * steps + i, last_block), 0)

    kernel = functools.partial(
        _focal_loss_kernel,
        n_total=n_total, steps_per_slice=steps, block_rows=TM, block_cols=C,
        full_blocks=full_blocks, needs_mask=needs_mask,
        alpha=alpha, gamma=gamma, pos_weight=pos_weight)

    partials = pl.pallas_call(
        kernel,
        out_shape=jax.ShapeDtypeStruct((P, 1, 1), jnp.float32),
        grid_spec=pltpu.PrefetchScalarGridSpec(
            num_scalar_prefetch=0,
            grid=(P, steps),
            in_specs=[
                pl.BlockSpec((TM, C), in_map),
                pl.BlockSpec((TM, C), in_map),
            ],
            out_specs=pl.BlockSpec((1, 1, 1), lambda p, i: (p, 0, 0)),
            scratch_shapes=[pltpu.VMEM((TM, 1), jnp.float32)],
        ),
        compiler_params=pltpu.CompilerParams(
            # Leading axis: independent partial sums -> sharded across the two
            # TensorCores on v7x; trailing axis: sequential reduction.
            dimension_semantics=("parallel", "arbitrary"),
        ),
    )(x2, t2)
    return jnp.sum(partials) * (1.0 / n_total)


def _reference(inputs, targets, alpha=ALPHA, gamma=GAMMA, pos_weight=POS_WEIGHT):
    """Pure-JAX reference matching the PyTorch FocalLoss forward."""
    inputs = inputs.astype(jnp.float32)
    targets = targets.astype(jnp.float32)
    probs = jax.nn.sigmoid(inputs)
    log_p = jax.nn.log_sigmoid(inputs)
    log_1mp = jax.nn.log_sigmoid(-inputs)
    pw = 1.0 if pos_weight is None else pos_weight
    ce = -(pw * targets * log_p + (1.0 - targets) * log_1mp)
    p_t = probs * targets + (1.0 - probs) * (1.0 - targets)
    focal_w = (1.0 - p_t) ** gamma
    if alpha is not None:
        alpha_t = alpha * targets + (1.0 - alpha) * (1.0 - targets)
        loss = alpha_t * focal_w * ce
    else:
        loss = focal_w * ce
    return jnp.mean(loss)


if __name__ == "__main__":
    key = jax.random.PRNGKey(0)
    k1, k2, k3, k4 = jax.random.split(key, 4)

    # Case 1: lane-aligned label dim -> copy-free fast path; small block_rows
    # forces a multi-step grid and exercises the 2-way parallel reduction axis.
    B, L = 32, 128
    x1 = jax.random.normal(k1, (B, L), dtype=jnp.float32)
    t1 = jax.random.bernoulli(k2, p=0.3, shape=(B, L)).astype(jnp.float32)
    out1 = focal_loss(x1, t1, block_rows=8)
    jax.block_until_ready(out1)
    assert out1.shape == ()
    ref1 = _reference(x1, t1)
    assert jnp.allclose(out1, ref1, atol=1e-5, rtol=1e-5), (out1, ref1)

    # Case 2: non-default alpha exercises the general alpha_t branch.
    out2 = focal_loss(x1, t1, alpha=0.25, block_rows=16)
    jax.block_until_ready(out2)
    ref2 = _reference(x1, t1, alpha=0.25)
    assert jnp.allclose(out2, ref2, atol=1e-5, rtol=1e-5), (out2, ref2)

    # Case 3: ragged shape -> padded fallback path + gated tail mask.
    x3 = jax.random.normal(k3, (5, 7, 19), dtype=jnp.float32)
    t3 = jax.random.bernoulli(k4, p=0.5, shape=(5, 7, 19)).astype(jnp.float32)
    out3 = focal_loss(x3, t3, block_cols=128)
    jax.block_until_ready(out3)
    ref3 = _reference(x3, t3)
    assert jnp.allclose(out3, ref3, atol=1e-5, rtol=1e-5), (out3, ref3)

    print("KERNEL_OK")
</pallas_src>

<mosaic_0001>
module attributes {stable_mosaic.version = 11 : i64} {
  func.func @_focal_loss_kernel(%arg0: i32, %arg1: i32, %arg2: memref<8x128xf32, #tpu.memory_space<vmem>>, %arg3: memref<8x128xf32, #tpu.memory_space<vmem>>, %arg4: memref<1x1x1xf32, #tpu.memory_space<vmem>>, %arg5: memref<8x1xf32, #tpu.memory_space<vmem>>) attributes {dimension_semantics = [#tpu.dimension_semantics<parallel>, #tpu.dimension_semantics<arbitrary>], iteration_bounds = array<i64: 2, 2>, scalar_prefetch = 0 : i64, scratch_operands = 1 : i64, tpu.core_type = #tpu.core_type<tc>, window_params = [{transform_indices = @transform_0, window_bounds = array<i64: 8, 128>}, {transform_indices = @transform_1, window_bounds = array<i64: 8, 128>}, {transform_indices = @transform_2, window_bounds = array<i64: 1, 1, 1>}]} {
    %c0_i32 = arith.constant 0 : i32
    %0 = arith.cmpi eq, %arg1, %c0_i32 : i32
    %1 = arith.extui %0 : i1 to i32
    %c0_i32_0 = arith.constant 0 : i32
    %2 = arith.cmpi ne, %1, %c0_i32_0 : i32
    scf.if %2 {
      %cst_15 = arith.constant 0.000000e+00 : f32
      %42 = vector.broadcast %cst_15 : f32 to vector<8x1xf32>
      %c0_16 = arith.constant 0 : index
      %c0_17 = arith.constant 0 : index
      %43 = vector.load %arg5[%c0_16, %c0_17] : memref<8x1xf32, #tpu.memory_space<vmem>>, vector<8x1xf32>
      tpu.vector_store %arg5[%c0_16, %c0_17], %42 {strides = array<i32>} : memref<8x1xf32, #tpu.memory_space<vmem>>, vector<8x1xf32>,
    } else {
    }
    %c0 = arith.constant 0 : index
    %c0_1 = arith.constant 0 : index
    %3 = vector.load %arg2[%c0, %c0_1] : memref<8x128xf32, #tpu.memory_space<vmem>>, vector<8x128xf32>
    %c0_2 = arith.constant 0 : index
    %c0_3 = arith.constant 0 : index
    %4 = vector.load %arg3[%c0_2, %c0_3] : memref<8x128xf32, #tpu.memory_space<vmem>>, vector<8x128xf32>
    %5 = math.absf %3 : vector<8x128xf32>
    %cst = arith.constant 0.000000e+00 : f32
    %6 = vector.broadcast %cst : f32 to vector<8x128xf32>
    %7 = arith.subf %6, %5 : vector<8x128xf32>
    %8 = math.exp %7 : vector<8x128xf32>
    %cst_4 = arith.constant 1.000000e+00 : f32
    %9 = vector.broadcast %cst_4 : f32 to vector<8x128xf32>
    %10 = arith.addf %9, %8 : vector<8x128xf32>
    %cst_5 = arith.constant 0.000000e+00 : f32
    %11 = vector.broadcast %cst_5 : f32 to vector<8x128xf32>
    %12 = arith.maximumf %3, %11 : vector<8x128xf32>
    %13 = math.log %10 : vector<8x128xf32>
    %14 = arith.addf %12, %13 : vector<8x128xf32>
    %15 = arith.mulf %4, %3 : vector<8x128xf32>
    %16 = arith.subf %14, %15 : vector<8x128xf32>
    %17 = tpu.reciprocal %10 {approx = true} : vector<8x128xf32> -> vector<8x128xf32>
    %18 = arith.mulf %10, %17 : vector<8x128xf32>
    %cst_6 = arith.constant 2.000000e+00 : f32
    %19 = vector.broadcast %cst_6 : f32 to vector<8x128xf32>
    %20 = arith.subf %19, %18 : vector<8x128xf32>
    %21 = arith.mulf %17, %20 : vector<8x128xf32>
    %cst_7 = arith.constant 0.000000e+00 : f32
    %22 = vector.broadcast %cst_7 : f32 to vector<8x128xf32>
    %23 = arith.cmpf oge, %3, %22 : vector<8x128xf32>
    %24 = arith.mulf %8, %21 : vector<8x128xf32>
    %25 = arith.select %23, %21, %24 : vector<8x128xi1>, vector<8x128xf32>
    %26 = arith.addf %25, %4 : vector<8x128xf32>
    %27 = arith.mulf %25, %4 : vector<8x128xf32>
    %cst_8 = arith.constant 2.000000e+00 : f32
    %28 = vector.broadcast %cst_8 : f32 to vector<8x128xf32>
    %29 = arith.mulf %28, %27 : vector<8x128xf32>
    %30 = arith.subf %26, %29 : vector<8x128xf32>
    %31 = arith.mulf %30, %30 : vector<8x128xf32>
    %32 = arith.mulf %31, %16 : vector<8x128xf32>
    %33 = arith.mulf %4, %32 : vector<8x128xf32>
    %c0_9 = arith.constant 0 : index
    %c0_10 = arith.constant 0 : index
    %34 = vector.load %arg5[%c0_9, %c0_10] : memref<8x1xf32, #tpu.memory_space<vmem>>, vector<8x1xf32>
    %cst_11 = arith.constant dense<0.000000e+00> : vector<8xf32>
    %35 = vector.multi_reduction <add>, %33, %cst_11 [1] : vector<8x128xf32> to vector<8xf32>
    %36 = vector.shape_cast %35 : vector<8xf32> to vector<8x1xf32>
    %37 = arith.addf %34, %36 : vector<8x1xf32>
    %c0_12 = arith.constant 0 : index
    %c0_13 = arith.constant 0 : index
    %38 = vector.load %arg5[%c0_12, %c0_13] : memref<8x1xf32, #tpu.memory_space<vmem>>, vector<8x1xf32>
    tpu.vector_store %arg5[%c0_12, %c0_13], %37 {strides = array<i32>} : memref<8x1xf32, #tpu.memory_space<vmem>>, vector<8x1xf32>,
    %c1_i32 = arith.constant 1 : i32
    %39 = arith.cmpi eq, %arg1, %c1_i32 : i32
    %40 = arith.extui %39 : i1 to i32
    %c0_i32_14 = arith.constant 0 : i32
    %41 = arith.cmpi ne, %40, %c0_i32_14 : i32
    scf.if %41 {
      %c0_15 = arith.constant 0 : index
      %c0_16 = arith.constant 0 : index
      %42 = vector.load %arg5[%c0_15, %c0_16] : memref<8x1xf32, #tpu.memory_space<vmem>>, vector<8x1xf32>
      %43 = vector.shape_cast %42 : vector<8x1xf32> to vector<1x8x1xf32>
      %cst_17 = arith.constant dense<0.000000e+00> : vector<1xf32>
      %44 = vector.multi_reduction <add>, %43, %cst_17 [1, 2] : vector<1x8x1xf32> to vector<1xf32>
      %45 = vector.shape_cast %44 : vector<1xf32> to vector<1x1x1xf32>
      %46 = vector.extract %45[0, 0, 0] : f32 from vector<1x1x1xf32>
      %47 = vector.broadcast %46 : f32 to vector<1x1x1xf32>
      %c0_18 = arith.constant 0 : index
      %c0_19 = arith.constant 0 : index
      %c0_20 = arith.constant 0 : index
      %48 = vector.load %arg4[%c0_18, %c0_19, %c0_20] : memref<1x1x1xf32, #tpu.memory_space<vmem>>, vector<1x1x1xf32>
      tpu.vector_store %arg4[%c0_18, %c0_19, %c0_20], %47 {strides = array<i32>} : memref<1x1x1xf32, #tpu.memory_space<vmem>>, vector<1x1x1xf32>,
    } else {
    }
    return
  }
  func.func @transform_0(%arg0: i32, %arg1: i32) -> (i32, i32) {
    %c2_i32 = arith.constant 2 : i32
    %0 = arith.muli %arg0, %c2_i32 : i32
    %1 = arith.addi %0, %arg1 : i32
    %c3_i32 = arith.constant 3 : i32
    %2 = arith.minsi %1, %c3_i32 : i32
    %c0_i32 = arith.constant 0 : i32
    %c0_i32_0 = arith.constant 0 : i32
    return %2, %c0_i32 : i32, i32
  }
  func.func @transform_1(%arg0: i32, %arg1: i32) -> (i32, i32) {
    %c2_i32 = arith.constant 2 : i32
    %0 = arith.muli %arg0, %c2_i32 : i32
    %1 = arith.addi %0, %arg1 : i32
    %c3_i32 = arith.constant 3 : i32
    %2 = arith.minsi %1, %c3_i32 : i32
    %c0_i32 = arith.constant 0 : i32
    %c0_i32_0 = arith.constant 0 : i32
    return %2, %c0_i32 : i32, i32
  }
  func.func @transform_2(%arg0: i32, %arg1: i32) -> (i32, i32, i32) {
    %c0_i32 = arith.constant 0 : i32
    %c0_i32_0 = arith.constant 0 : i32
    %c0_i32_1 = arith.constant 0 : i32
    return %arg0, %c0_i32, %c0_i32_0 : i32, i32, i32
  }
}

</mosaic_0001>

<llo_original>
// kernel: tpu_custom_call.1
$region0: #{tpu_custom_call.1}
  #allocation0 [shape = 'u32[]', space=smem, size = 0x4, offset = 0x4, fixed_abs, tag = 'smem constant byte address 0x4 - core index']
  #allocation1 [shape = 'u32[144,128]{1,0:T(1,128)}', space=vmem, size = 0x12000, scoped, tag = 'internal scratch']
  #allocation2 [shape = 'f32[8,1]{1,0:T(8,128)}', space=vmem, size = 0x1000, scoped, tag = 'scratch operand']
  %s0 = inlined_call_operand.hbm [shape: f32[32,128], index: 0, kind: input, shape index: {}]
  %s1 = inlined_call_operand.hbm [shape: f32[32,128], index: 1, kind: input, shape index: {}]
  %s2 = inlined_call_operand.vmem [shape: f32[2,1,1], index: 2, kind: output, shape index: {}]
  %s3 = sld [smem:[#allocation0]]
  $region57: #{tpu_custom_call.1} parent=0
    _
  %s5 = ssub.s32 1, %s3
  %s6 = scalar_select 0, %s5, %s3
  $region1: #{tpu_custom_call.1} parent=0
    #allocation3 [shape = 'u8[8192]{0}', space=vmem, size = 0x2000, scoped, tag = 'input window, operand 0']
    #allocation4 [shape = 's32[2]{0}', space=sflag, size = 0x8, scoped, tag = 'scoped memory for tpu_custom_call.1']
    #allocation5 [shape = 'u8[8192]{0}', space=vmem, size = 0x2000, scoped, tag = 'input window, operand 1']
    #allocation6 [shape = 's32[2]{0}', space=sflag, size = 0x8, scoped, tag = 'scoped memory for tpu_custom_call.1']
    %7 = vsyncpa [#allocation4], 0
    %s8 = scalar_lea.sflag [#allocation4], 1
    %9 = vsyncpa %s8, 0
    %10 = vsyncpa [#allocation6], 0
    %s11 = scalar_lea.sflag [#allocation6], 1
    %12 = vsyncpa %s11, 0
    loop: start=0, step=1, limit=6
    $region2: #{tpu_custom_call.1} parent=1 // loop_pre_header
      _
    $region3: #{tpu_custom_call.1} parent=1 // loop_header
      %s14 = sphi 0, %s18
      %p15 = scmp.ge.s32.totalorder %s14, 6
      %s21 = sphi 0, %s33
      %s22 = sphi 0, %s29
      %s23 = sphi 0, %s21
      %s24 = sphi 0, %s22
      %s25 = sphi 0, %s23
      %s26 = sphi 0, %s24
      %s44 = sphi 0, %s46
      %s47 = sphi 0, %s44
      %s48 = sphi 0, %s47
      %s64 = sphi 0, %s48
      %s78 = sphi 0, %s80
      %s81 = sphi 0, %s78
      %s82 = sphi 0, %s81
      %s98 = sphi 0, %s82
      %s104 = sphi 0, %s106
      %s107 = sphi 0, %s104
      %s108 = sphi 0, %s107
      %s124 = sphi 0, %s108
    $region4: #{tpu_custom_call.1} parent=1 // loop_header_branch
      %17 = sbr.rel (%p15) target = $region8
    $region5: #{tpu_custom_call.1} parent=1 // loop_body
      %s19 = ssub.s32 %s14, 1
      %s20 = ssub.s32 %s14, 2
      %s27 = sadd.s32 1, %s22
      %p28 = scmp.ge.s32.totalorder %s27, 2
      %s29 = scalar_select %p28, 0, %s27
      %s30 = sadd.s32 1, %s21
      %s31 = scalar_select %p28, %s30, %s21
      %p32 = scmp.ge.s32.totalorder %s31, 2
      %s33 = scalar_select %p32, 0, %s31
      %s34 = smul.u32 %s21, 2
      %s35 = sadd.s32 %s34, %s22
      %p36 = scmp.lt.s32.totalorder %s35, 3
      %s37 = scalar_select %p36, %s35, 3
      %s38 = smul.u32 %s33, 2
      %s39 = sadd.s32 %s38, %s29
      %p40 = scmp.lt.s32.totalorder %s39, 3
      %s41 = scalar_select %p40, %s39, 3
      %s42 = ssub.s32 %s37, %s41
      %p43 = scmp.eq.s32.totalorder %s42, 0
      %s45 = sadd.s32 %s44, 1
      %s46 = scalar_select %p43, %s44, %s45
      %p49 = pneg %p43
      %p50 = scmp.eq.s32.totalorder %s14, 3
      %p51 = por %p49, %p50
      %p52 = scmp.ne.s32.totalorder %s44, %s47
      %p53 = scmp.eq.s32.totalorder %s14, 0
      %p54 = por %p52, %p53
      %p55 = scmp.ne.s32.totalorder %s44, %s47
      %p56 = scmp.eq.s32.totalorder %s19, 3
      %p57 = por %p55, %p56
      %p58 = scmp.ne.s32.totalorder %s47, %s48
      %p59 = scmp.eq.s32.totalorder %s19, 0
      %p60 = por %p58, %p59
      %p61 = scmp.ne.s32.totalorder %s47, %s48
      %p62 = scmp.eq.s32.totalorder %s20, 3
      %p63 = por %p61, %p62
      %p65 = scmp.ne.s32.totalorder %s48, %s64
      %p66 = scmp.eq.s32.totalorder %s20, 0
      %p67 = por %p65, %p66
      %s68 = smul.u32 %s21, 2
      %s69 = sadd.s32 %s68, %s22
      %p70 = scmp.lt.s32.totalorder %s69, 3
      %s71 = scalar_select %p70, %s69, 3
      %s72 = smul.u32 %s33, 2
      %s73 = sadd.s32 %s72, %s29
      %p74 = scmp.lt.s32.totalorder %s73, 3
      %s75 = scalar_select %p74, %s73, 3
      %s76 = ssub.s32 %s71, %s75
      %p77 = scmp.eq.s32.totalorder %s76, 0
      %s79 = sadd.s32 %s78, 1
      %s80 = scalar_select %p77, %s78, %s79
      %p83 = pneg %p77
      %p84 = scmp.eq.s32.totalorder %s14, 3
      %p85 = por %p83, %p84
      %p86 = scmp.ne.s32.totalorder %s78, %s81
      %p87 = scmp.eq.s32.totalorder %s14, 0
      %p88 = por %p86, %p87
      %p89 = scmp.ne.s32.totalorder %s78, %s81
      %p90 = scmp.eq.s32.totalorder %s19, 3
      %p91 = por %p89, %p90
      %p92 = scmp.ne.s32.totalorder %s81, %s82
      %p93 = scmp.eq.s32.totalorder %s19, 0
      %p94 = por %p92, %p93
      %p95 = scmp.ne.s32.totalorder %s81, %s82
      %p96 = scmp.eq.s32.totalorder %s20, 3
      %p97 = por %p95, %p96
      %p99 = scmp.ne.s32.totalorder %s82, %s98
      %p100 = scmp.eq.s32.totalorder %s20, 0
      %p101 = por %p99, %p100
      %s102 = ssub.s32 %s21, %s33
      %p103 = scmp.eq.s32.totalorder %s102, 0
      %s105 = sadd.s32 %s104, 1
      %s106 = scalar_select %p103, %s104, %s105
      %p109 = pneg %p103
      %p110 = scmp.eq.s32.totalorder %s14, 3
      %p111 = por %p109, %p110
      %p112 = scmp.ne.s32.totalorder %s104, %s107
      %p113 = scmp.eq.s32.totalorder %s14, 0
      %p114 = por %p112, %p113
      %p115 = scmp.ne.s32.totalorder %s104, %s107
      %p116 = scmp.eq.s32.totalorder %s19, 3
      %p117 = por %p115, %p116
      %p118 = scmp.ne.s32.totalorder %s107, %s108
      %p119 = scmp.eq.s32.totalorder %s19, 0
      %p120 = por %p118, %p119
      %p121 = scmp.ne.s32.totalorder %s107, %s108
      %p122 = scmp.eq.s32.totalorder %s20, 3
      %p123 = por %p121, %p122
      %p125 = scmp.ne.s32.totalorder %s108, %s124
      %p126 = scmp.eq.s32.totalorder %s20, 0
      %p127 = por %p125, %p126
      %p128 = scmp.le.s32.totalorder 1, %s14
      %p129 = scmp.lt.s32.totalorder %s14, 5
      %p130 = pnand %p128, %p129
      %p131 = pneg %p130
      // Predicated region
      $region9: #{tpu_custom_call.1} parent=5 // pred_check
        _
      $region10: #{tpu_custom_call.1} parent=5 // pred_check_branch
        %133 = sbr.rel (%p130) target = $region12
      $region11: #{tpu_custom_call.1} parent=5 // pred_region
        %s134 = ssub.s32 %s14, 1
      $region12: #{tpu_custom_call.1} parent=5 // pred_fallthru
        _
      %p135 = scmp.lt.s32.totalorder %s14, 4
      // Predicated region
      $region13: #{tpu_custom_call.1} parent=5 // pred_check
        %p136 = pneg %p135
      $region14: #{tpu_custom_call.1} parent=5 // pred_check_branch
        %138 = sbr.rel (%p136) target = $region16
      $region15: #{tpu_custom_call.1} parent=5 // pred_region
        // Predicated region
        $region17: #{tpu_custom_call.1} parent=15 // pred_check
          %p139 = pneg %p54
        $region18: #{tpu_custom_call.1} parent=15 // pred_check_branch
          %141 = sbr.rel (%p139) target = $region20
        $region19: #{tpu_custom_call.1} parent=15 // pred_region
          %s142 = sand.u32 %s44, 1
          %s143 = scalar_lea.sflag [#allocation4], %s142
          %s144 = sand.u32 %s44, 1
          %s145 = smul.addr %s144, 8
          %s146 = scalar_lea.vmem [#allocation3], %s145
          %s147 = smul.u32 %s21, 2
          %s148 = sadd.s32 %s147, %s22
          %p149 = scmp.lt.s32.totalorder %s148, 3
          %s150 = scalar_select %p149, %s148, 3
          %s152 = ssub.s32 128, 128
          %153 = vsyncadd %s143, %s152
          %s154 = smul.addr %s150, 128
          %s155 = scalar_lea.hbm %s0, %s154
          %s157 = sshll.u32 %s146, 4
          %s158 = int_to_ptr.vmem [resolvable:$true] %s157
          %160 = dma.hbm_to_vmem [thread:$0]  %s155, 128, %s158, %s143
        $region20: #{tpu_custom_call.1} parent=15 // pred_fallthru
          _
        // Predicated region
        $region21: #{tpu_custom_call.1} parent=15 // pred_check
          %p161 = pneg %p88
        $region22: #{tpu_custom_call.1} parent=15 // pred_check_branch
          %163 = sbr.rel (%p161) target = $region24
        $region23: #{tpu_custom_call.1} parent=15 // pred_region
          %s164 = sand.u32 %s78, 1
          %s165 = scalar_lea.sflag [#allocation6], %s164
          %s166 = sand.u32 %s78, 1
          %s167 = smul.addr %s166, 8
          %s168 = scalar_lea.vmem [#allocation5], %s167
          %s169 = smul.u32 %s21, 2
          %s170 = sadd.s32 %s169, %s22
          %p171 = scmp.lt.s32.totalorder %s170, 3
          %s172 = scalar_select %p171, %s170, 3
          %s174 = ssub.s32 128, 128
          %175 = vsyncadd %s165, %s174
          %s176 = smul.addr %s172, 128
          %s177 = scalar_lea.hbm %s1, %s176
          %s179 = sshll.u32 %s168, 4
          %s180 = int_to_ptr.vmem [resolvable:$true] %s179
          %182 = dma.hbm_to_vmem [thread:$0]  %s177, 128, %s180, %s165
        $region24: #{tpu_custom_call.1} parent=15 // pred_fallthru
          _
      $region16: #{tpu_custom_call.1} parent=5 // pred_fallthru
        _
      %p183 = scmp.le.s32.totalorder 1, %s14
      %p184 = scmp.lt.s32.totalorder %s14, 5
      %p185 = pnand %p183, %p184
      %p186 = pneg %p185
      // Predicated region
      $region25: #{tpu_custom_call.1} parent=5 // pred_check
        _
      $region26: #{tpu_custom_call.1} parent=5 // pred_check_branch
        %188 = sbr.rel (%p185) target = $region28
      $region27: #{tpu_custom_call.1} parent=5 // pred_region
        %s189 = ssub.s32 %s14, 1
        %s190 = sand.u32 %s47, 1
        %s191 = scalar_lea.sflag [#allocation4], %s190
        %s192 = sand.u32 %s47, 1
        %s193 = smul.addr %s192, 8
        %s194 = scalar_lea.vmem [#allocation3], %s193
        // Predicated region
        $region29: #{tpu_custom_call.1} parent=27 // pred_check
          %p195 = pneg %p60
        $region30: #{tpu_custom_call.1} parent=27 // pred_check_branch
          %197 = sbr.rel (%p195) target = $region32
        $region31: #{tpu_custom_call.1} parent=27 // pred_region
          %198 = dma.done %s191, 128
        $region32: #{tpu_custom_call.1} parent=27 // pred_fallthru
          _
        %s199 = sand.u32 %s81, 1
        %s200 = scalar_lea.sflag [#allocation6], %s199
        %s201 = sand.u32 %s81, 1
        %s202 = smul.addr %s201, 8
        %s203 = scalar_lea.vmem [#allocation5], %s202
        // Predicated region
        $region33: #{tpu_custom_call.1} parent=27 // pred_check
          %p204 = pneg %p94
        $region34: #{tpu_custom_call.1} parent=27 // pred_check_branch
          %206 = sbr.rel (%p204) target = $region36
        $region35: #{tpu_custom_call.1} parent=27 // pred_region
          %207 = dma.done %s200, 128
        $region36: #{tpu_custom_call.1} parent=27 // pred_fallthru
          _
        %s208 = sand.u32 %s47, 1
        %s209 = scalar_lea.sflag [#allocation4], %s208
        %s210 = sand.u32 %s47, 1
        %s211 = smul.addr %s210, 8
        %s212 = scalar_lea.vmem [#allocation3], %s211
        %p213 = pneg %p60
        %p214 = pneg %p57
        %s215 = sand.u32 %s81, 1
        %s216 = scalar_lea.sflag [#allocation6], %s215
        %s217 = sand.u32 %s81, 1
        %s218 = smul.addr %s217, 8
        %s219 = scalar_lea.vmem [#allocation5], %s218
        %p220 = pneg %p94
        %p221 = pneg %p91
        %p222 = pneg %p120
        %p223 = pneg %p117
        %p224 = scmp.lt.s32.totalorder %s23, 1
        %s225 = scalar_select %p224, %s23, 1
        %s226 = scalar_lea.vmem %s2, %s225
        %s227 = smul.u32 %s23, 2
        %s228 = sadd.s32 %s227, %s24
        %p229 = scmp.lt.s32.totalorder %s228, 3
        %s230 = scalar_select %p229, %s228, 3
        %s231 = smul.u32 %s23, 2
        %s232 = sadd.s32 %s231, %s24
        %p233 = scmp.lt.s32.totalorder %s232, 3
        %s234 = scalar_select %p233, %s232, 3
        %p235 = scmp.lt.s32.totalorder %s23, 1
        %s236 = scalar_select %p235, %s23, 1
        %s237 = scalar_lea.vmem %s2, %s236
        %p238 = scmp.eq.s32.totalorder %s24, 0
        // Predicated region
        $region37: #{tpu_custom_call.1} parent=27 // pred_check
          %p239 = pneg %p238
        $region38: #{tpu_custom_call.1} parent=27 // pred_check_branch
          %241 = sbr.rel (%p239) target = $region40
        $region39: #{tpu_custom_call.1} parent=27 // pred_region
          %vm242 = vcmask 7168
          %243 = vst.msk [vmem:[#allocation2] sm:$0xff] %vm242, 0.0
        $region40: #{tpu_custom_call.1} parent=27 // pred_fallthru
          _
        %v244 = vld [vmem:[%s194] sm:$0xff]
        %v245 = vld [vmem:[%s203] sm:$0xff]
        %v246 = vand.u32 2147483647, %v244
        %v247 = vsub.f32 0.0, %v246
        %v248 = vmul.f32 %v247, 1.442695
        %v249 = vpow.pop %v248
        %v250 = vadd.f32 %v249, 1.0
        %v251 = vmax.f32 %v244, 0.0
        %v252 = vlog2.pop %v250
        %v253 = vmul.f32 %v252, 0.6931472
        %v254 = vadd.f32 %v251, %v253
        %v255 = vmul.f32 %v245, %v244
        %v256 = vsub.f32 %v254, %v255
        %v257 = vrcp.pop %v250
        %v258 = vmul.f32 %v250, %v257
        %v259 = vsub.f32 2.0, %v258
        %v260 = vmul.f32 %v257, %v259
        %vm261 = vcmp.ge.f32.partialorder %v244, 0.0
        %v262 = vmul.f32 %v249, %v260
        %v263 = vsel %vm261, %v260, %v262
        %v264 = vadd.f32 %v263, %v245
        %v265 = vmul.f32 %v263, %v245
        %v266 = vmul.f32 %v265, 2.0
        %v267 = vsub.f32 %v264, %v266
        %v268 = vmul.f32 %v267, %v267
        %v269 = vmul.f32 %v268, %v256
        %v270 = vmul.f32 %v245, %v269
        %v271 = vld [vmem:[#allocation2] sm:$0xff]
        %272 = vadd.xlane.f32.xlu0 %v270
        %v273 = vpop.xlane.xlu0 %272
        %v274 = vadd.f32 %v271, %v273
        %vm275 = vcmask 7168
        %276 = vst.msk [vmem:[#allocation2] sm:$0xff] %vm275, %v274
        %p277 = scmp.eq.s32.totalorder %s24, 1
        // Predicated region
        $region41: #{tpu_custom_call.1} parent=27 // pred_check
          %p278 = pneg %p277
        $region42: #{tpu_custom_call.1} parent=27 // pred_check_branch
          %280 = sbr.rel (%p278) target = $region44
        $region43: #{tpu_custom_call.1} parent=27 // pred_region
          %v281 = vld [vmem:[#allocation2] sm:$0xff]
          %v282 = vsel %vm275, %v281, 0.0
          %283 = vadd.xlane.f32.xlu0 %v282
          %v284 = vpop.xlane.xlu0 %283
          %v285 = vrot.slane %v284, 4
          %v286 = vadd.f32 %v284, %v285
          %v287 = vrot.slane %v286, 2
          %v288 = vadd.f32 %v286, %v287
          %v289 = vrot.slane %v288, 1
          %v290 = vadd.f32 %v288, %v289
          %s291 = vtos %v290
          %v292 = vstv %s291
          %vm293 = vcmask 0
          %294 = vst.msk [vmem:[%s237] sm:$0x1] %vm293, %v292
        $region44: #{tpu_custom_call.1} parent=27 // pred_fallthru
          _
        %p295 = scmp.lt.s32.totalorder %s23, 1
        %s296 = scalar_select %p295, %s23, 1
        %s297 = scalar_lea.vmem %s2, %s296
        // Predicated region
        $region45: #{tpu_custom_call.1} parent=27 // pred_check
          %p298 = pneg %p117
        $region46: #{tpu_custom_call.1} parent=27 // pred_check_branch
          %300 = sbr.rel (%p298) target = $region48
        $region47: #{tpu_custom_call.1} parent=27 // pred_region
          _
        $region48: #{tpu_custom_call.1} parent=27 // pred_fallthru
          _
      $region28: #{tpu_custom_call.1} parent=5 // pred_fallthru
        _
      %p301 = scmp.le.s32.totalorder 2, %s14
      // Predicated region
      $region49: #{tpu_custom_call.1} parent=5 // pred_check
        %p302 = pneg %p301
      $region50: #{tpu_custom_call.1} parent=5 // pred_check_branch
        %304 = sbr.rel (%p302) target = $region52
      $region51: #{tpu_custom_call.1} parent=5 // pred_region
        %s305 = ssub.s32 %s14, 2
        // Predicated region
        $region53: #{tpu_custom_call.1} parent=51 // pred_check
          %p306 = pneg %p123
        $region54: #{tpu_custom_call.1} parent=51 // pred_check_branch
          %308 = sbr.rel (%p306) target = $region56
        $region55: #{tpu_custom_call.1} parent=51 // pred_region
          %p309 = scmp.lt.s32.totalorder %s25, 1
          %s310 = scalar_select %p309, %s25, 1
          %s311 = scalar_lea.vmem %s2, %s310
        $region56: #{tpu_custom_call.1} parent=51 // pred_fallthru
          _
      $region52: #{tpu_custom_call.1} parent=5 // pred_fallthru
        _
    $region6: #{tpu_custom_call.1} parent=1 // loop_footer
      %s18 = sadd.s32 1, %s14
    $region7: #{tpu_custom_call.1} parent=1 // loop_footer_branch
      %13 = sbr.rel target = $region3
    $region8: #{tpu_custom_call.1} parent=1 // loop_exit
      _
    %312 = vsyncpa [#allocation4], 1
    %s313 = scalar_lea.sflag [#allocation4], 1
    %314 = vsyncpa %s313, 1
    %315 = vsyncpa [#allocation6], 1
    %s316 = scalar_lea.sflag [#allocation6], 1
    %317 = vsyncpa %s316, 1

</llo_original>
